<compile_context>
chip_gen: v5e
topology: v5e:2x2
jax: 0.10.0
libtpu: 0.0.40
codegen_flags: <defaults>
</compile_context>

<pallas_src>
import jax
import jax.numpy as jnp
from jax.experimental import pallas as pl
from jax.experimental.pallas import tpu as pltpu

# ---------------------------------------------------------------------------
# Problem sizes (small, consistent with the module's forward).
# ---------------------------------------------------------------------------
B = 2            # batch
S = 8            # sequence length
H = 32           # hidden_size
N_HEADS = 4      # num attention heads
HD = H // N_HEADS
I = 4 * H        # intermediate_size (GPT-2 convention)
T = B * S        # total tokens (flattened batch*seq)
LN_EPS = 1e-5


def _layer_norm(v, g, b):
    mu = jnp.mean(v, axis=-1, keepdims=True)
    var = jnp.mean((v - mu) ** 2, axis=-1, keepdims=True)
    return (v - mu) * jax.lax.rsqrt(var + LN_EPS) * g + b


def gpt2_layer_kernel(
    x_ref, mask_ref,
    ln1g_ref, ln1b_ref,
    wqkv_ref, bqkv_ref,
    wo_ref, bo_ref,
    ln2g_ref, ln2b_ref,
    w1_ref, b1_ref, w2_ref, b2_ref,
    out_ref,
):
    x = x_ref[...]                       # (T, H): all tokens of all batches
    mask = mask_ref[...]                 # (T, T): combined additive mask

    # ---- pre-attention LayerNorm ------------------------------------------
    xn = _layer_norm(x, ln1g_ref[...], ln1b_ref[...])

    # ---- fused QKV projection: one lane-dense (T,H)@(H,3H) matmul ----------
    qkv = jnp.dot(xn, wqkv_ref[...],
                  preferred_element_type=jnp.float32) + bqkv_ref[...]   # (T, 3H)
    q = qkv[:, 0:H]
    k = qkv[:, H:2 * H]
    v = qkv[:, 2 * H:3 * H]

    scale = 1.0 / (float(HD) ** 0.5)

    # ---- per-head attention: static 8-lane slices, short unrolled loop -----
    ctx_parts = []
    for h in range(N_HEADS):
        lo, hi = h * HD, (h + 1) * HD
        qh = q[:, lo:hi]                                           # (T, HD)
        kh = k[:, lo:hi]
        vh = v[:, lo:hi]
        s = jnp.dot(qh, kh.T, preferred_element_type=jnp.float32) * scale + mask
        m = jnp.max(s, axis=-1, keepdims=True)
        p = jnp.exp(s - m)
        p = p * pl.reciprocal(jnp.sum(p, axis=-1, keepdims=True), approx=True)
        ctx_parts.append(jnp.dot(p, vh, preferred_element_type=jnp.float32))
    ctx = jnp.concatenate(ctx_parts, axis=-1)                      # (T, H)

    # ---- attention output dense: one (T,H)@(H,H) matmul --------------------
    attn_out = jnp.dot(ctx, wo_ref[...],
                       preferred_element_type=jnp.float32) + bo_ref[...]

    # ---- residual (attention_dropout = identity) ----------------------------
    h1 = x + attn_out

    # ---- feed-forward block --------------------------------------------------
    h1n = _layer_norm(h1, ln2g_ref[...], ln2b_ref[...])
    inter = jnp.dot(h1n, w1_ref[...],
                    preferred_element_type=jnp.float32) + b1_ref[...]
    # TODO(synk): F.gelu default is the exact erf-based GELU; tanh approximation
    # used here for robust Mosaic lowering (diff ~1e-3 of GELU output).
    inter = jax.nn.gelu(inter, approximate=True)
    ff = jnp.dot(inter, w2_ref[...],
                 preferred_element_type=jnp.float32) + b2_ref[...]

    # ---- residual (out_dropout = identity) ----------------------------------
    out_ref[...] = h1 + ff


# ---------------------------------------------------------------------------
# One-time parameter preparation (hoisted out of the per-call path).
# ---------------------------------------------------------------------------
def prepare_params(params):
    (ln1g, ln1b, wq, bq, wk, bk, wv, bv, wo, bo,
     ln2g, ln2b, w1, b1, w2, b2) = params

    # Fused QKV weight / bias (pure relayout, done once).
    wqkv = jnp.concatenate([wq, wk, wv], axis=-1)        # (H, 3H)
    bqkv = jnp.concatenate([bq, bk, bv], axis=-1)        # (1, 3H)

    # Structural additive mask over the flattened token axis:
    # block-diagonal (same batch element) AND causal (key <= query).
    row = jnp.arange(T, dtype=jnp.int32)[:, None]
    col = jnp.arange(T, dtype=jnp.int32)[None, :]
    allowed = jnp.logical_and((row // S) == (col // S), col <= row)
    struct_mask = jnp.where(allowed, 0.0, -1e9).astype(jnp.float32)   # (T, T)

    return (struct_mask, ln1g, ln1b, wqkv, bqkv, wo, bo,
            ln2g, ln2b, w1, b1, w2, b2)


def gpt2_layer(x, attn_mask, prepped):
    """x: (B, S, H) f32; attn_mask: (B, 1, S) additive f32; prepped from prepare_params."""
    (struct_mask, ln1g, ln1b, wqkv, bqkv, wo, bo,
     ln2g, ln2b, w1, b1, w2, b2) = prepped

    x_flat = x.reshape(T, H)
    # Combined additive mask (structural + key padding), computed once per call.
    full_mask = struct_mask + attn_mask.reshape(1, T)

    operands = (x_flat, full_mask, ln1g, ln1b, wqkv, bqkv, wo, bo,
                ln2g, ln2b, w1, b1, w2, b2)

    vmem = pl.BlockSpec(memory_space=pltpu.MemorySpace.VMEM)

    out_flat = pl.pallas_call(
        gpt2_layer_kernel,
        out_shape=jax.ShapeDtypeStruct((T, H), jnp.float32),
        in_specs=[vmem] * len(operands),
        out_specs=vmem,
    )(*operands)
    return out_flat.reshape(B, S, H)


# ---------------------------------------------------------------------------
# Pure-JAX reference (same math) for a correctness check.
# ---------------------------------------------------------------------------
def gpt2_layer_ref(x, attn_mask, params):
    (ln1g, ln1b, wq, bq, wk, bk, wv, bv, wo, bo,
     ln2g, ln2b, w1, b1, w2, b2) = params
    xn = _layer_norm(x, ln1g, ln1b)
    q = xn @ wq + bq
    k = xn @ wk + bk
    v = xn @ wv + bv
    q = q.reshape(B, S, N_HEADS, HD).transpose(0, 2, 1, 3)
    k = k.reshape(B, S, N_HEADS, HD).transpose(0, 2, 1, 3)
    v = v.reshape(B, S, N_HEADS, HD).transpose(0, 2, 1, 3)
    s = jnp.einsum("bhqd,bhkd->bhqk", q, k) / (HD ** 0.5)
    row = jnp.arange(S)[:, None]
    col = jnp.arange(S)[None, :]
    causal = jnp.where(col <= row, 0.0, -1e9)
    s = s + causal[None, None] + attn_mask[:, None, :, :]
    p = jax.nn.softmax(s, axis=-1)
    ctx = jnp.einsum("bhqk,bhkd->bhqd", p, v).transpose(0, 2, 1, 3).reshape(B, S, H)
    h1 = x + (ctx @ wo + bo)
    h1n = _layer_norm(h1, ln2g, ln2b)
    ff = jax.nn.gelu(h1n @ w1 + b1, approximate=True) @ w2 + b2
    return h1 + ff


def init_params(key):
    ks = jax.random.split(key, 8)
    sc = 0.02
    ln1g = jnp.ones((1, H), jnp.float32)
    ln1b = jnp.zeros((1, H), jnp.float32)
    wq = sc * jax.random.normal(ks[0], (H, H), jnp.float32)
    wk = sc * jax.random.normal(ks[1], (H, H), jnp.float32)
    wv = sc * jax.random.normal(ks[2], (H, H), jnp.float32)
    wo = sc * jax.random.normal(ks[3], (H, H), jnp.float32)
    bq = jnp.zeros((1, H), jnp.float32)
    bk = jnp.zeros((1, H), jnp.float32)
    bv = jnp.zeros((1, H), jnp.float32)
    bo = jnp.zeros((1, H), jnp.float32)
    ln2g = jnp.ones((1, H), jnp.float32)
    ln2b = jnp.zeros((1, H), jnp.float32)
    w1 = sc * jax.random.normal(ks[4], (H, I), jnp.float32)
    b1 = jnp.zeros((1, I), jnp.float32)
    w2 = sc * jax.random.normal(ks[5], (I, H), jnp.float32)
    b2 = jnp.zeros((1, H), jnp.float32)
    return (ln1g, ln1b, wq, bq, wk, bk, wv, bv, wo, bo,
            ln2g, ln2b, w1, b1, w2, b2)


if __name__ == "__main__":
    key = jax.random.PRNGKey(0)
    k_x, k_p = jax.random.split(key)

    x = jax.random.normal(k_x, (B, S, H), jnp.float32)
    # Additive attention mask: last 2 tokens of batch element 1 are padding.
    valid = jnp.ones((B, S), jnp.float32).at[1, -2:].set(0.0)
    attn_mask = ((1.0 - valid) * -1e9).reshape(B, 1, S)

    params = init_params(k_p)
    prepped = prepare_params(params)      # one-time weight relayout / mask prep

    out = gpt2_layer(x, attn_mask, prepped)
    out = jax.block_until_ready(out)

    ref = gpt2_layer_ref(x, attn_mask, params)
    assert out.shape == (B, S, H)
    assert jnp.allclose(out, ref, atol=1e-4, rtol=1e-4), "mismatch vs reference"

    print("KERNEL_OK")
</pallas_src>

<mosaic_0001>
module attributes {stable_mosaic.version = 11 : i64} {
  func.func @gpt2_layer_kernel(%arg0: memref<16x32xf32, #tpu.memory_space<vmem>>, %arg1: memref<16x16xf32, #tpu.memory_space<vmem>>, %arg2: memref<1x32xf32, #tpu.memory_space<vmem>>, %arg3: memref<1x32xf32, #tpu.memory_space<vmem>>, %arg4: memref<32x96xf32, #tpu.memory_space<vmem>>, %arg5: memref<1x96xf32, #tpu.memory_space<vmem>>, %arg6: memref<32x32xf32, #tpu.memory_space<vmem>>, %arg7: memref<1x32xf32, #tpu.memory_space<vmem>>, %arg8: memref<1x32xf32, #tpu.memory_space<vmem>>, %arg9: memref<1x32xf32, #tpu.memory_space<vmem>>, %arg10: memref<32x128xf32, #tpu.memory_space<vmem>>, %arg11: memref<1x128xf32, #tpu.memory_space<vmem>>, %arg12: memref<128x32xf32, #tpu.memory_space<vmem>>, %arg13: memref<1x32xf32, #tpu.memory_space<vmem>>, %arg14: memref<16x32xf32, #tpu.memory_space<vmem>>) attributes {dimension_semantics = [], scalar_prefetch = 0 : i64, scratch_operands = 0 : i64, tpu.core_type = #tpu.core_type<tc>} {
    %c0 = arith.constant 0 : index
    %c0_0 = arith.constant 0 : index
    %0 = vector.load %arg0[%c0, %c0_0] : memref<16x32xf32, #tpu.memory_space<vmem>>, vector<16x32xf32>
    %c0_1 = arith.constant 0 : index
    %c0_2 = arith.constant 0 : index
    %1 = vector.load %arg1[%c0_1, %c0_2] : memref<16x16xf32, #tpu.memory_space<vmem>>, vector<16x16xf32>
    %c0_3 = arith.constant 0 : index
    %c0_4 = arith.constant 0 : index
    %2 = vector.load %arg2[%c0_3, %c0_4] : memref<1x32xf32, #tpu.memory_space<vmem>>, vector<1x32xf32>
    %c0_5 = arith.constant 0 : index
    %c0_6 = arith.constant 0 : index
    %3 = vector.load %arg3[%c0_5, %c0_6] : memref<1x32xf32, #tpu.memory_space<vmem>>, vector<1x32xf32>
    %cst = arith.constant dense<0.000000e+00> : vector<16xf32>
    %4 = vector.multi_reduction <add>, %0, %cst [1] : vector<16x32xf32> to vector<16xf32>
    %5 = vector.shape_cast %4 : vector<16xf32> to vector<16x1xf32>
    %cst_7 = arith.constant 3.200000e+01 : f32
    %6 = vector.broadcast %cst_7 : f32 to vector<16x1xf32>
    %7 = arith.divf %5, %6 : vector<16x1xf32>
    %8 = vector.broadcast %7 : vector<16x1xf32> to vector<16x32xf32>
    %9 = arith.subf %0, %8 : vector<16x32xf32>
    %10 = arith.mulf %9, %9 : vector<16x32xf32>
    %cst_8 = arith.constant dense<0.000000e+00> : vector<16xf32>
    %11 = vector.multi_reduction <add>, %10, %cst_8 [1] : vector<16x32xf32> to vector<16xf32>
    %12 = vector.shape_cast %11 : vector<16xf32> to vector<16x1xf32>
    %cst_9 = arith.constant 3.200000e+01 : f32
    %13 = vector.broadcast %cst_9 : f32 to vector<16x1xf32>
    %14 = arith.divf %12, %13 : vector<16x1xf32>
    %15 = vector.broadcast %7 : vector<16x1xf32> to vector<16x32xf32>
    %16 = arith.subf %0, %15 : vector<16x32xf32>
    %cst_10 = arith.constant 9.99999974E-6 : f32
    %17 = vector.broadcast %cst_10 : f32 to vector<16x1xf32>
    %18 = arith.addf %14, %17 : vector<16x1xf32>
    %19 = math.rsqrt %18 : vector<16x1xf32>
    %20 = vector.broadcast %19 : vector<16x1xf32> to vector<16x32xf32>
    %21 = arith.mulf %16, %20 : vector<16x32xf32>
    %22 = vector.broadcast %2 : vector<1x32xf32> to vector<16x32xf32>
    %23 = arith.mulf %21, %22 : vector<16x32xf32>
    %24 = vector.broadcast %3 : vector<1x32xf32> to vector<16x32xf32>
    %25 = arith.addf %23, %24 : vector<16x32xf32>
    %c0_11 = arith.constant 0 : index
    %c0_12 = arith.constant 0 : index
    %26 = vector.load %arg4[%c0_11, %c0_12] : memref<32x96xf32, #tpu.memory_space<vmem>>, vector<32x96xf32>
    %cst_13 = arith.constant dense<0.000000e+00> : vector<16x96xf32>
    %27 = tpu.matmul %25, %26, %cst_13 {dimension_numbers = #tpu.dot_dimension_numbers<[1], [0], [0], [1], [0, 0, 1, 1], [], []>} : vector<16x32xf32>, vector<32x96xf32>, vector<16x96xf32> -> vector<16x96xf32>
    %c0_14 = arith.constant 0 : index
    %c0_15 = arith.constant 0 : index
    %28 = vector.load %arg5[%c0_14, %c0_15] : memref<1x96xf32, #tpu.memory_space<vmem>>, vector<1x96xf32>
    %29 = vector.broadcast %28 : vector<1x96xf32> to vector<16x96xf32>
    %30 = arith.addf %27, %29 : vector<16x96xf32>
    %31 = vector.extract_strided_slice %30 {offsets = [0, 0], sizes = [16, 32], strides = [1, 1]} : vector<16x96xf32> to vector<16x32xf32>
    %32 = vector.extract_strided_slice %30 {offsets = [0, 32], sizes = [16, 32], strides = [1, 1]} : vector<16x96xf32> to vector<16x32xf32>
    %33 = vector.extract_strided_slice %30 {offsets = [0, 64], sizes = [16, 32], strides = [1, 1]} : vector<16x96xf32> to vector<16x32xf32>
    %34 = vector.extract_strided_slice %31 {offsets = [0, 0], sizes = [16, 8], strides = [1, 1]} : vector<16x32xf32> to vector<16x8xf32>
    %35 = vector.extract_strided_slice %32 {offsets = [0, 0], sizes = [16, 8], strides = [1, 1]} : vector<16x32xf32> to vector<16x8xf32>
    %36 = vector.extract_strided_slice %33 {offsets = [0, 0], sizes = [16, 8], strides = [1, 1]} : vector<16x32xf32> to vector<16x8xf32>
    %37 = tpu.transpose %35, [1, 0] : vector<16x8xf32> -> vector<8x16xf32>
    %cst_16 = arith.constant dense<0.000000e+00> : vector<16x16xf32>
    %38 = tpu.matmul %34, %37, %cst_16 {dimension_numbers = #tpu.dot_dimension_numbers<[1], [0], [0], [1], [0, 0, 1, 1], [], []>} : vector<16x8xf32>, vector<8x16xf32>, vector<16x16xf32> -> vector<16x16xf32>
    %cst_17 = arith.constant 0.353553385 : f32
    %39 = vector.broadcast %cst_17 : f32 to vector<16x16xf32>
    %40 = arith.mulf %38, %39 : vector<16x16xf32>
    %41 = arith.addf %40, %1 : vector<16x16xf32>
    %cst_18 = arith.constant dense<0xFF800000> : vector<16xf32>
    %42 = vector.multi_reduction <maximumf>, %41, %cst_18 [1] : vector<16x16xf32> to vector<16xf32>
    %43 = vector.shape_cast %42 : vector<16xf32> to vector<16x1xf32>
    %44 = vector.broadcast %43 : vector<16x1xf32> to vector<16x16xf32>
    %45 = arith.subf %41, %44 : vector<16x16xf32>
    %46 = math.exp %45 : vector<16x16xf32>
    %cst_19 = arith.constant dense<0.000000e+00> : vector<16xf32>
    %47 = vector.multi_reduction <add>, %46, %cst_19 [1] : vector<16x16xf32> to vector<16xf32>
    %48 = vector.shape_cast %47 : vector<16xf32> to vector<16x1xf32>
    %49 = tpu.reciprocal %48 {approx = true} : vector<16x1xf32> -> vector<16x1xf32>
    %50 = vector.broadcast %49 : vector<16x1xf32> to vector<16x16xf32>
    %51 = arith.mulf %46, %50 : vector<16x16xf32>
    %cst_20 = arith.constant dense<0.000000e+00> : vector<16x8xf32>
    %52 = tpu.matmul %51, %36, %cst_20 {dimension_numbers = #tpu.dot_dimension_numbers<[1], [0], [0], [1], [0, 0, 1, 1], [], []>} : vector<16x16xf32>, vector<16x8xf32>, vector<16x8xf32> -> vector<16x8xf32>
    %53 = vector.extract_strided_slice %31 {offsets = [0, 8], sizes = [16, 8], strides = [1, 1]} : vector<16x32xf32> to vector<16x8xf32>
    %54 = vector.extract_strided_slice %32 {offsets = [0, 8], sizes = [16, 8], strides = [1, 1]} : vector<16x32xf32> to vector<16x8xf32>
    %55 = vector.extract_strided_slice %33 {offsets = [0, 8], sizes = [16, 8], strides = [1, 1]} : vector<16x32xf32> to vector<16x8xf32>
    %56 = tpu.transpose %54, [1, 0] : vector<16x8xf32> -> vector<8x16xf32>
    %cst_21 = arith.constant dense<0.000000e+00> : vector<16x16xf32>
    %57 = tpu.matmul %53, %56, %cst_21 {dimension_numbers = #tpu.dot_dimension_numbers<[1], [0], [0], [1], [0, 0, 1, 1], [], []>} : vector<16x8xf32>, vector<8x16xf32>, vector<16x16xf32> -> vector<16x16xf32>
    %cst_22 = arith.constant 0.353553385 : f32
    %58 = vector.broadcast %cst_22 : f32 to vector<16x16xf32>
    %59 = arith.mulf %57, %58 : vector<16x16xf32>
    %60 = arith.addf %59, %1 : vector<16x16xf32>
    %cst_23 = arith.constant dense<0xFF800000> : vector<16xf32>
    %61 = vector.multi_reduction <maximumf>, %60, %cst_23 [1] : vector<16x16xf32> to vector<16xf32>
    %62 = vector.shape_cast %61 : vector<16xf32> to vector<16x1xf32>
    %63 = vector.broadcast %62 : vector<16x1xf32> to vector<16x16xf32>
    %64 = arith.subf %60, %63 : vector<16x16xf32>
    %65 = math.exp %64 : vector<16x16xf32>
    %cst_24 = arith.constant dense<0.000000e+00> : vector<16xf32>
    %66 = vector.multi_reduction <add>, %65, %cst_24 [1] : vector<16x16xf32> to vector<16xf32>
    %67 = vector.shape_cast %66 : vector<16xf32> to vector<16x1xf32>
    %68 = tpu.reciprocal %67 {approx = true} : vector<16x1xf32> -> vector<16x1xf32>
    %69 = vector.broadcast %68 : vector<16x1xf32> to vector<16x16xf32>
    %70 = arith.mulf %65, %69 : vector<16x16xf32>
    %cst_25 = arith.constant dense<0.000000e+00> : vector<16x8xf32>
    %71 = tpu.matmul %70, %55, %cst_25 {dimension_numbers = #tpu.dot_dimension_numbers<[1], [0], [0], [1], [0, 0, 1, 1], [], []>} : vector<16x16xf32>, vector<16x8xf32>, vector<16x8xf32> -> vector<16x8xf32>
    %72 = vector.extract_strided_slice %31 {offsets = [0, 16], sizes = [16, 8], strides = [1, 1]} : vector<16x32xf32> to vector<16x8xf32>
    %73 = vector.extract_strided_slice %32 {offsets = [0, 16], sizes = [16, 8], strides = [1, 1]} : vector<16x32xf32> to vector<16x8xf32>
    %74 = vector.extract_strided_slice %33 {offsets = [0, 16], sizes = [16, 8], strides = [1, 1]} : vector<16x32xf32> to vector<16x8xf32>
    %75 = tpu.transpose %73, [1, 0] : vector<16x8xf32> -> vector<8x16xf32>
    %cst_26 = arith.constant dense<0.000000e+00> : vector<16x16xf32>
    %76 = tpu.matmul %72, %75, %cst_26 {dimension_numbers = #tpu.dot_dimension_numbers<[1], [0], [0], [1], [0, 0, 1, 1], [], []>} : vector<16x8xf32>, vector<8x16xf32>, vector<16x16xf32> -> vector<16x16xf32>
    %cst_27 = arith.constant 0.353553385 : f32
    %77 = vector.broadcast %cst_27 : f32 to vector<16x16xf32>
    %78 = arith.mulf %76, %77 : vector<16x16xf32>
    %79 = arith.addf %78, %1 : vector<16x16xf32>
    %cst_28 = arith.constant dense<0xFF800000> : vector<16xf32>
    %80 = vector.multi_reduction <maximumf>, %79, %cst_28 [1] : vector<16x16xf32> to vector<16xf32>
    %81 = vector.shape_cast %80 : vector<16xf32> to vector<16x1xf32>
    %82 = vector.broadcast %81 : vector<16x1xf32> to vector<16x16xf32>
    %83 = arith.subf %79, %82 : vector<16x16xf32>
    %84 = math.exp %83 : vector<16x16xf32>
    %cst_29 = arith.constant dense<0.000000e+00> : vector<16xf32>
    %85 = vector.multi_reduction <add>, %84, %cst_29 [1] : vector<16x16xf32> to vector<16xf32>
    %86 = vector.shape_cast %85 : vector<16xf32> to vector<16x1xf32>
    %87 = tpu.reciprocal %86 {approx = true} : vector<16x1xf32> -> vector<16x1xf32>
    %88 = vector.broadcast %87 : vector<16x1xf32> to vector<16x16xf32>
    %89 = arith.mulf %84, %88 : vector<16x16xf32>
    %cst_30 = arith.constant dense<0.000000e+00> : vector<16x8xf32>
    %90 = tpu.matmul %89, %74, %cst_30 {dimension_numbers = #tpu.dot_dimension_numbers<[1], [0], [0], [1], [0, 0, 1, 1], [], []>} : vector<16x16xf32>, vector<16x8xf32>, vector<16x8xf32> -> vector<16x8xf32>
    %91 = vector.extract_strided_slice %31 {offsets = [0, 24], sizes = [16, 8], strides = [1, 1]} : vector<16x32xf32> to vector<16x8xf32>
    %92 = vector.extract_strided_slice %32 {offsets = [0, 24], sizes = [16, 8], strides = [1, 1]} : vector<16x32xf32> to vector<16x8xf32>
    %93 = vector.extract_strided_slice %33 {offsets = [0, 24], sizes = [16, 8], strides = [1, 1]} : vector<16x32xf32> to vector<16x8xf32>
    %94 = tpu.transpose %92, [1, 0] : vector<16x8xf32> -> vector<8x16xf32>
    %cst_31 = arith.constant dense<0.000000e+00> : vector<16x16xf32>
    %95 = tpu.matmul %91, %94, %cst_31 {dimension_numbers = #tpu.dot_dimension_numbers<[1], [0], [0], [1], [0, 0, 1, 1], [], []>} : vector<16x8xf32>, vector<8x16xf32>, vector<16x16xf32> -> vector<16x16xf32>
    %cst_32 = arith.constant 0.353553385 : f32
    %96 = vector.broadcast %cst_32 : f32 to vector<16x16xf32>
    %97 = arith.mulf %95, %96 : vector<16x16xf32>
    %98 = arith.addf %97, %1 : vector<16x16xf32>
    %cst_33 = arith.constant dense<0xFF800000> : vector<16xf32>
    %99 = vector.multi_reduction <maximumf>, %98, %cst_33 [1] : vector<16x16xf32> to vector<16xf32>
    %100 = vector.shape_cast %99 : vector<16xf32> to vector<16x1xf32>
    %101 = vector.broadcast %100 : vector<16x1xf32> to vector<16x16xf32>
    %102 = arith.subf %98, %101 : vector<16x16xf32>
    %103 = math.exp %102 : vector<16x16xf32>
    %cst_34 = arith.constant dense<0.000000e+00> : vector<16xf32>
    %104 = vector.multi_reduction <add>, %103, %cst_34 [1] : vector<16x16xf32> to vector<16xf32>
    %105 = vector.shape_cast %104 : vector<16xf32> to vector<16x1xf32>
    %106 = tpu.reciprocal %105 {approx = true} : vector<16x1xf32> -> vector<16x1xf32>
    %107 = vector.broadcast %106 : vector<16x1xf32> to vector<16x16xf32>
    %108 = arith.mulf %103, %107 : vector<16x16xf32>
    %cst_35 = arith.constant dense<0.000000e+00> : vector<16x8xf32>
    %109 = tpu.matmul %108, %93, %cst_35 {dimension_numbers = #tpu.dot_dimension_numbers<[1], [0], [0], [1], [0, 0, 1, 1], [], []>} : vector<16x16xf32>, vector<16x8xf32>, vector<16x8xf32> -> vector<16x8xf32>
    %110 = tpu.concatenate %52, %71, %90, %109 in 1 : vector<16x8xf32>, vector<16x8xf32>, vector<16x8xf32>, vector<16x8xf32> -> vector<16x32xf32>
    %c0_36 = arith.constant 0 : index
    %c0_37 = arith.constant 0 : index
    %111 = vector.load %arg6[%c0_36, %c0_37] : memref<32x32xf32, #tpu.memory_space<vmem>>, vector<32x32xf32>
    %cst_38 = arith.constant dense<0.000000e+00> : vector<16x32xf32>
    %112 = tpu.matmul %110, %111, %cst_38 {dimension_numbers = #tpu.dot_dimension_numbers<[1], [0], [0], [1], [0, 0, 1, 1], [], []>} : vector<16x32xf32>, vector<32x32xf32>, vector<16x32xf32> -> vector<16x32xf32>
    %c0_39 = arith.constant 0 : index
    %c0_40 = arith.constant 0 : index
    %113 = vector.load %arg7[%c0_39, %c0_40] : memref<1x32xf32, #tpu.memory_space<vmem>>, vector<1x32xf32>
    %114 = vector.broadcast %113 : vector<1x32xf32> to vector<16x32xf32>
    %115 = arith.addf %112, %114 : vector<16x32xf32>
    %116 = arith.addf %0, %115 : vector<16x32xf32>
    %c0_41 = arith.constant 0 : index
    %c0_42 = arith.constant 0 : index
    %117 = vector.load %arg8[%c0_41, %c0_42] : memref<1x32xf32, #tpu.memory_space<vmem>>, vector<1x32xf32>
    %c0_43 = arith.constant 0 : index
    %c0_44 = arith.constant 0 : index
    %118 = vector.load %arg9[%c0_43, %c0_44] : memref<1x32xf32, #tpu.memory_space<vmem>>, vector<1x32xf32>
    %cst_45 = arith.constant dense<0.000000e+00> : vector<16xf32>
    %119 = vector.multi_reduction <add>, %116, %cst_45 [1] : vector<16x32xf32> to vector<16xf32>
    %120 = vector.shape_cast %119 : vector<16xf32> to vector<16x1xf32>
    %cst_46 = arith.constant 3.200000e+01 : f32
    %121 = vector.broadcast %cst_46 : f32 to vector<16x1xf32>
    %122 = arith.divf %120, %121 : vector<16x1xf32>
    %123 = vector.broadcast %122 : vector<16x1xf32> to vector<16x32xf32>
    %124 = arith.subf %116, %123 : vector<16x32xf32>
    %125 = arith.mulf %124, %124 : vector<16x32xf32>
    %cst_47 = arith.constant dense<0.000000e+00> : vector<16xf32>
    %126 = vector.multi_reduction <add>, %125, %cst_47 [1] : vector<16x32xf32> to vector<16xf32>
    %127 = vector.shape_cast %126 : vector<16xf32> to vector<16x1xf32>
    %cst_48 = arith.constant 3.200000e+01 : f32
    %128 = vector.broadcast %cst_48 : f32 to vector<16x1xf32>
    %129 = arith.divf %127, %128 : vector<16x1xf32>
    %130 = vector.broadcast %122 : vector<16x1xf32> to vector<16x32xf32>
    %131 = arith.subf %116, %130 : vector<16x32xf32>
    %cst_49 = arith.constant 9.99999974E-6 : f32
    %132 = vector.broadcast %cst_49 : f32 to vector<16x1xf32>
    %133 = arith.addf %129, %132 : vector<16x1xf32>
    %134 = math.rsqrt %133 : vector<16x1xf32>
    %135 = vector.broadcast %134 : vector<16x1xf32> to vector<16x32xf32>
    %136 = arith.mulf %131, %135 : vector<16x32xf32>
    %137 = vector.broadcast %117 : vector<1x32xf32> to vector<16x32xf32>
    %138 = arith.mulf %136, %137 : vector<16x32xf32>
    %139 = vector.broadcast %118 : vector<1x32xf32> to vector<16x32xf32>
    %140 = arith.addf %138, %139 : vector<16x32xf32>
    %c0_50 = arith.constant 0 : index
    %c0_51 = arith.constant 0 : index
    %141 = vector.load %arg10[%c0_50, %c0_51] : memref<32x128xf32, #tpu.memory_space<vmem>>, vector<32x128xf32>
    %cst_52 = arith.constant dense<0.000000e+00> : vector<16x128xf32>
    %142 = tpu.matmul %140, %141, %cst_52 {dimension_numbers = #tpu.dot_dimension_numbers<[1], [0], [0], [1], [0, 0, 1, 1], [], []>} : vector<16x32xf32>, vector<32x128xf32>, vector<16x128xf32> -> vector<16x128xf32>
    %c0_53 = arith.constant 0 : index
    %c0_54 = arith.constant 0 : index
    %143 = vector.load %arg11[%c0_53, %c0_54] : memref<1x128xf32, #tpu.memory_space<vmem>>, vector<1x128xf32>
    %144 = vector.broadcast %143 : vector<1x128xf32> to vector<16x128xf32>
    %145 = arith.addf %142, %144 : vector<16x128xf32>
    %146 = arith.mulf %145, %145 : vector<16x128xf32>
    %147 = arith.mulf %145, %146 : vector<16x128xf32>
    %cst_55 = arith.constant 4.471500e-02 : f32
    %148 = vector.broadcast %cst_55 : f32 to vector<16x128xf32>
    %149 = arith.mulf %148, %147 : vector<16x128xf32>
    %150 = arith.addf %145, %149 : vector<16x128xf32>
    %cst_56 = arith.constant 0.797884583 : f32
    %151 = vector.broadcast %cst_56 : f32 to vector<16x128xf32>
    %152 = arith.mulf %151, %150 : vector<16x128xf32>
    %153 = math.tanh %152 : vector<16x128xf32>
    %cst_57 = arith.constant 1.000000e+00 : f32
    %154 = vector.broadcast %cst_57 : f32 to vector<16x128xf32>
    %155 = arith.addf %154, %153 : vector<16x128xf32>
    %cst_58 = arith.constant 5.000000e-01 : f32
    %156 = vector.broadcast %cst_58 : f32 to vector<16x128xf32>
    %157 = arith.mulf %156, %155 : vector<16x128xf32>
    %158 = arith.mulf %145, %157 : vector<16x128xf32>
    %c0_59 = arith.constant 0 : index
    %c0_60 = arith.constant 0 : index
    %159 = vector.load %arg12[%c0_59, %c0_60] : memref<128x32xf32, #tpu.memory_space<vmem>>, vector<128x32xf32>
    %cst_61 = arith.constant dense<0.000000e+00> : vector<16x32xf32>
    %160 = tpu.matmul %158, %159, %cst_61 {dimension_numbers = #tpu.dot_dimension_numbers<[1], [0], [0], [1], [0, 0, 1, 1], [], []>} : vector<16x128xf32>, vector<128x32xf32>, vector<16x32xf32> -> vector<16x32xf32>
    %c0_62 = arith.constant 0 : index
    %c0_63 = arith.constant 0 : index
    %161 = vector.load %arg13[%c0_62, %c0_63] : memref<1x32xf32, #tpu.memory_space<vmem>>, vector<1x32xf32>
    %162 = vector.broadcast %161 : vector<1x32xf32> to vector<16x32xf32>
    %163 = arith.addf %160, %162 : vector<16x32xf32>
    %164 = arith.addf %116, %163 : vector<16x32xf32>
    %c0_64 = arith.constant 0 : index
    %c0_65 = arith.constant 0 : index
    %165 = vector.load %arg14[%c0_64, %c0_65] : memref<16x32xf32, #tpu.memory_space<vmem>>, vector<16x32xf32>
    tpu.vector_store %arg14[%c0_64, %c0_65], %164 {strides = array<i32>} : memref<16x32xf32, #tpu.memory_space<vmem>>, vector<16x32xf32>,
    return
  }
}

</mosaic_0001>

<llo_original>
// kernel: tpu_custom_call.1
$region0: #{tpu_custom_call.1}
  #allocation0 [shape = 'u32[]', space=smem, size = 0x4, offset = 0x4, fixed_abs, tag = 'smem constant byte address 0x4 - core index']
  #allocation1 [shape = 'u32[72,128]{1,0:T(1,128)}', space=vmem, size = 0x9000, scoped, tag = 'internal scratch']
  %s0 = inlined_call_operand.vmem [shape: f32[16,32], index: 0, kind: input, shape index: {}]
  %s1 = inlined_call_operand.vmem [shape: f32[16,16], index: 1, kind: input, shape index: {}]
  %s2 = inlined_call_operand.vmem [shape: f32[1,32], index: 2, kind: input, shape index: {}]
  %s3 = inlined_call_operand.vmem [shape: f32[1,32], index: 3, kind: input, shape index: {}]
  %s4 = inlined_call_operand.vmem [shape: f32[32,96], index: 4, kind: input, shape index: {}]
  %s5 = inlined_call_operand.vmem [shape: f32[1,96], index: 5, kind: input, shape index: {}]
  %s6 = inlined_call_operand.vmem [shape: f32[32,32], index: 6, kind: input, shape index: {}]
  %s7 = inlined_call_operand.vmem [shape: f32[1,32], index: 7, kind: input, shape index: {}]
  %s8 = inlined_call_operand.vmem [shape: f32[1,32], index: 8, kind: input, shape index: {}]
  %s9 = inlined_call_operand.vmem [shape: f32[1,32], index: 9, kind: input, shape index: {}]
  %s10 = inlined_call_operand.vmem [shape: f32[32,128], index: 10, kind: input, shape index: {}]
  %s11 = inlined_call_operand.vmem [shape: f32[1,128], index: 11, kind: input, shape index: {}]
  %s12 = inlined_call_operand.vmem [shape: f32[128,32], index: 12, kind: input, shape index: {}]
  %s13 = inlined_call_operand.vmem [shape: f32[1,32], index: 13, kind: input, shape index: {}]
  %s14 = inlined_call_operand.hbm [shape: f32[16,32], index: 14, kind: output, shape index: {}]
  %s15 = sld [smem:[#allocation0]]
  $region66: #{tpu_custom_call.1} parent=0
    _
  %s17 = ssub.s32 1, %s15
  %s18 = scalar_select 0, %s17, %s15
  $region1: #{tpu_custom_call.1} parent=0
    #allocation2 [shape = 'u8[8192]{0}', space=vmem, size = 0x2000, scoped, tag = 'output window, operand 0, single buffered']
    #allocation3 [shape = 's32[1]{0}', space=sflag, size = 0x4, scoped, tag = 'scoped memory for tpu_custom_call.1']
    %19 = vsyncpa [#allocation3], 0
    // Predicated region
    $region2: #{tpu_custom_call.1} parent=1 // pred_check
      _
    $region3: #{tpu_custom_call.1} parent=1 // pred_check_branch
      %21 = sbr.rel (0) target = $region5
    $region4: #{tpu_custom_call.1} parent=1 // pred_region
      _
    $region5: #{tpu_custom_call.1} parent=1 // pred_fallthru
      _
    // Predicated region
    $region6: #{tpu_custom_call.1} parent=1 // pred_check
      _
    $region7: #{tpu_custom_call.1} parent=1 // pred_check_branch
      %23 = sbr.rel (0) target = $region9
    $region8: #{tpu_custom_call.1} parent=1 // pred_region
      _
    $region9: #{tpu_custom_call.1} parent=1 // pred_fallthru
      _
    // Predicated region
    $region10: #{tpu_custom_call.1} parent=1 // pred_check
      _
    $region11: #{tpu_custom_call.1} parent=1 // pred_check_branch
      %25 = sbr.rel (0) target = $region13
    $region12: #{tpu_custom_call.1} parent=1 // pred_region
      _
    $region13: #{tpu_custom_call.1} parent=1 // pred_fallthru
      _
    // Predicated region
    $region14: #{tpu_custom_call.1} parent=1 // pred_check
      _
    $region15: #{tpu_custom_call.1} parent=1 // pred_check_branch
      %27 = sbr.rel (0) target = $region17
    $region16: #{tpu_custom_call.1} parent=1 // pred_region
      _
    $region17: #{tpu_custom_call.1} parent=1 // pred_fallthru
      _
    // Predicated region
    $region18: #{tpu_custom_call.1} parent=1 // pred_check
      _
    $region19: #{tpu_custom_call.1} parent=1 // pred_check_branch
      %29 = sbr.rel (0) target = $region21
    $region20: #{tpu_custom_call.1} parent=1 // pred_region
      _
    $region21: #{tpu_custom_call.1} parent=1 // pred_fallthru
      _
    // Predicated region
    $region22: #{tpu_custom_call.1} parent=1 // pred_check
      _
    $region23: #{tpu_custom_call.1} parent=1 // pred_check_branch
      %31 = sbr.rel (0) target = $region25
    $region24: #{tpu_custom_call.1} parent=1 // pred_region
      _
    $region25: #{tpu_custom_call.1} parent=1 // pred_fallthru
      _
    // Predicated region
    $region26: #{tpu_custom_call.1} parent=1 // pred_check
      _
    $region27: #{tpu_custom_call.1} parent=1 // pred_check_branch
      %33 = sbr.rel (0) target = $region29
    $region28: #{tpu_custom_call.1} parent=1 // pred_region
      _
    $region29: #{tpu_custom_call.1} parent=1 // pred_fallthru
      _
    // Predicated region
    $region30: #{tpu_custom_call.1} parent=1 // pred_check
      _
    $region31: #{tpu_custom_call.1} parent=1 // pred_check_branch
      %35 = sbr.rel (0) target = $region33
    $region32: #{tpu_custom_call.1} parent=1 // pred_region
      _
    $region33: #{tpu_custom_call.1} parent=1 // pred_fallthru
      _
    // Predicated region
    $region34: #{tpu_custom_call.1} parent=1 // pred_check
      _
    $region35: #{tpu_custom_call.1} parent=1 // pred_check_branch
      %37 = sbr.rel (0) target = $region37
    $region36: #{tpu_custom_call.1} parent=1 // pred_region
      _
    $region37: #{tpu_custom_call.1} parent=1 // pred_fallthru
      _
    // Predicated region
    $region38: #{tpu_custom_call.1} parent=1 // pred_check
      _
    $region39: #{tpu_custom_call.1} parent=1 // pred_check_branch
      %39 = sbr.rel (0) target = $region41
    $region40: #{tpu_custom_call.1} parent=1 // pred_region
      _
    $region41: #{tpu_custom_call.1} parent=1 // pred_fallthru
      _
    // Predicated region
    $region42: #{tpu_custom_call.1} parent=1 // pred_check
      _
    $region43: #{tpu_custom_call.1} parent=1 // pred_check_branch
      %41 = sbr.rel (0) target = $region45
    $region44: #{tpu_custom_call.1} parent=1 // pred_region
      _
    $region45: #{tpu_custom_call.1} parent=1 // pred_fallthru
      _
    // Predicated region
    $region46: #{tpu_custom_call.1} parent=1 // pred_check
      _
    $region47: #{tpu_custom_call.1} parent=1 // pred_check_branch
      %43 = sbr.rel (0) target = $region49
    $region48: #{tpu_custom_call.1} parent=1 // pred_region
      _
    $region49: #{tpu_custom_call.1} parent=1 // pred_fallthru
      _
    // Predicated region
    $region50: #{tpu_custom_call.1} parent=1 // pred_check
      _
    $region51: #{tpu_custom_call.1} parent=1 // pred_check_branch
      %45 = sbr.rel (0) target = $region53
    $region52: #{tpu_custom_call.1} parent=1 // pred_region
      _
    $region53: #{tpu_custom_call.1} parent=1 // pred_fallthru
      _
    // Predicated region
    $region54: #{tpu_custom_call.1} parent=1 // pred_check
      _
    $region55: #{tpu_custom_call.1} parent=1 // pred_check_branch
      %47 = sbr.rel (0) target = $region57
    $region56: #{tpu_custom_call.1} parent=1 // pred_region
      _
    $region57: #{tpu_custom_call.1} parent=1 // pred_fallthru
      _
    %v48 = vld [vmem:[%s0] sm:$0xff]
    %v49 = vld [vmem:[%s0 + $0x8] sm:$0xff]
    %v50 = vld [vmem:[%s1] sm:$0xff]
    %v51 = vld [vmem:[%s1 + $0x8] sm:$0xff]
    %v52 = vld [vmem:[%s2] sm:$0x1]
    %v53 = vld [vmem:[%s3] sm:$0x1]
    %vm54 = vcmask 261120
    %v55 = vsel %vm54, %v48, 0.0
    %56 = vadd.xlane.f32.xlu0 %v55
    %v57 = vpop.xlane.xlu0 %56
    %v58 = vsel %vm54, %v49, 0.0
    %59 = vadd.xlane.f32.xlu0 %v58
    %v60 = vpop.xlane.xlu0 %59
    %v61 = vrcp.pop 32.0
    %v62 = vmul.f32 32.0, %v61
    %v63 = vsub.f32 1.0, %v62
    %v64 = vmul.f32 %v61, %v63
    %v65 = vadd.f32 %v61, %v64
    %vm66 = vweird.f32 %v61
    %v67 = vsel %vm66, %v61, %v65
    %v68 = vmul.f32 %v57, %v67
    %v69 = vmul.f32 %v60, %v67
    %v70 = vsub.f32 %v48, %v68
    %v71 = vsub.f32 %v49, %v69
    %v72 = vmul.f32 %v70, %v70
    %v73 = vmul.f32 %v71, %v71
    %v74 = vsel %vm54, %v72, 0.0
    %75 = vadd.xlane.f32.xlu0 %v74
    %v76 = vpop.xlane.xlu0 %75
    %v77 = vsel %vm54, %v73, 0.0
    %78 = vadd.xlane.f32.xlu0 %v77
    %v79 = vpop.xlane.xlu0 %78
    %v80 = vmul.f32 %v76, %v67
    %v81 = vmul.f32 %v79, %v67
    %v82 = vadd.f32 %v80, 1e-05
    %v83 = vadd.f32 %v81, 1e-05
    %v84 = vrsqrt.pop %v82
    %v85 = vmul.f32 %v84, %v82
    %v86 = vmul.f32 %v85, %v84
    %v87 = vmul.f32 0.5, %v86
    %v88 = vsub.f32 1.5, %v87
    %v89 = vmul.f32 %v84, %v88
    %vm90 = vweird.f32 %v82
    %vm91 = vweird.f32 %v84
    %vm92 = vmor %vm90, %vm91
    %v93 = vsel %vm92, %v84, %v89
    %v94 = vrsqrt.pop %v83
    %v95 = vmul.f32 %v94, %v83
    %v96 = vmul.f32 %v95, %v94
    %v97 = vmul.f32 0.5, %v96
    %v98 = vsub.f32 1.5, %v97
    %v99 = vmul.f32 %v94, %v98
    %vm100 = vweird.f32 %v83
    %vm101 = vweird.f32 %v94
    %vm102 = vmor %vm100, %vm101
    %v103 = vsel %vm102, %v94, %v99
    %v104 = vmul.f32 %v70, %v93
    %v105 = vmul.f32 %v71, %v103
    %v107 = vperm.slane %v52, 0
    %v109 = vmul.f32 %v104, %v107
    %v110 = vmul.f32 %v105, %v107
    %v112 = vperm.slane %v53, 0
    %v114 = vadd.f32 %v109, %v112
    %v115 = vadd.f32 %v110, %v112
    %v116 = vld [vmem:[%s4] sm:$0xff]
    %v117 = vld [vmem:[%s4 + $0x8] sm:$0xff]
    %v118 = vld [vmem:[%s4 + $0x10] sm:$0xff]
    %v119 = vld [vmem:[%s4 + $0x18] sm:$0xff]
    %v120 = vld [vmem:[%s5] sm:$0x1]
    %v122 = vperm.slane %v120, 0
    %v125 = vsel %vm54, %v114, 0
    %v128 = vsel %vm54, %v115, 0
    %130 = vmatpush.msra.mxu0 0.0
    %131 = vmatpush.msra.mxu0 0.0
    %132 = vmatpush.msra.mxu0 0.0
    %133 = vmatpush.msra.mxu0 0.0
    %134 = vmatpush.msra.mxu0 0.0
    %135 = vmatpush.msra.mxu0 0.0
    %136 = vmatpush.msra.mxu0 0.0
    %137 = vmatpush.msra.mxu0 0.0
    %138 = vmatpush.msra.mxu0 0.0
    %139 = vmatpush.msra.mxu0 0.0
    %140 = vmatpush.msra.mxu0 0.0
    %141 = vmatpush.msra.mxu0 0.0
    %142 = vmatpush.msra.mxu0 %v119
    %143 = vmatpush.msra.mxu0 %v118
    %144 = vmatpush.msra.mxu0 %v117
    %145 = vmatpush.msra.mxu0 %v116
    %146 = vmatmul.f32.gmra.mxu0 %v125
    %v147 = vpop.f32.mrf.mxu0
    %v148 = vadd.f32 %v122, %v147
    %149 = vmatmul.f32.gmra.mxu0 %v128
    %v150 = vpop.f32.mrf.mxu0
    %v151 = vadd.f32 %v122, %v150
    %152 = vdwg.mxu0
    %155 = vrot.lane.b32.xlu0 %v148, 96
    %v156 = vpop.permute.xlu0 %155
    %157 = vrot.lane.b32.xlu0 %v151, 96
    %v158 = vpop.permute.xlu0 %157
    %vm159 = vcmask 64512
    %v160 = vsel %vm159, %v148, 0
    %v162 = vsel %vm159, %v151, 0
    %v164 = vsel %vm159, %v156, 0
    %v166 = vsel %vm159, %v158, 0
    %168 = vmatpush.xpose.msra.mxu0 0.0
    %169 = vmatpush.xpose.msra.mxu0 0.0
    %170 = vmatpush.xpose.msra.mxu0 0.0
    %171 = vmatpush.xpose.msra.mxu0 0.0
    %172 = vmatpush.xpose.msra.mxu0 0.0
    %173 = vmatpush.xpose.msra.mxu0 0.0
    %174 = vmatpush.xpose.msra.mxu0 0.0
    %175 = vmatpush.xpose.msra.mxu0 0.0
    %176 = vmatpush.xpose.msra.mxu0 0.0
    %177 = vmatpush.xpose.msra.mxu0 0.0
    %178 = vmatpush.xpose.msra.mxu0 0.0
    %179 = vmatpush.xpose.msra.mxu0 0.0
    %180 = vmatpush.xpose.msra.mxu0 0.0
    %181 = vmatpush.xpose.msra.mxu0 0.0
    %182 = vmatpush.xpose.msra.mxu0 %v166
    %183 = vmatpush.xpose.msra.mxu0 %v164
    %184 = vmatmul.f32.gmra.mxu0 %v160
    %v185 = vpop.f32.mrf.mxu0
    %v186 = vadd.f32 0.0, %v185
    %187 = vmatmul.f32.gmra.mxu0 %v162
    %v188 = vpop.f32.mrf.mxu0
    %v189 = vadd.f32 0.0, %v188
    %190 = vdwg.mxu0
    %v191 = vmul.f32 %v186, 0.35355338
    %v192 = vmul.f32 %v189, 0.35355338
    %v193 = vadd.f32 %v191, %v50
    %v194 = vadd.f32 %v192, %v51
    %vm195 = vcmask 130048
    %v196 = vsel %vm195, %v193, -inf
    %197 = vmax.xlane.f32.xlu0 %v196
    %v198 = vpop.xlane.xlu0 %197
    %v199 = vsel %vm195, %v194, -inf
    %200 = vmax.xlane.f32.xlu0 %v199
    %v201 = vpop.xlane.xlu0 %200
    %v202 = vsub.f32 %v193, %v198
    %v203 = vsub.f32 %v194, %v201
    %v204 = vmul.f32 %v202, 1.442695
    %v205 = vpow.pop %v204
    %v206 = vmul.f32 %v203, 1.442695
    %v207 = vpow.pop %v206
    %v208 = vsel %vm195, %v205, 0.0
    %209 = vadd.xlane.f32.xlu0 %v208
    %v210 = vpop.xlane.xlu0 %209
    %v211 = vsel %vm195, %v207, 0.0
    %212 = vadd.xlane.f32.xlu0 %v211
    %v213 = vpop.xlane.xlu0 %212
    %v214 = vrcp.pop %v210
    %v215 = vrcp.pop %v213
    %v216 = vmul.f32 %v205, %v214
    %v217 = vmul.f32 %v207, %v215
    %218 = vrot.lane.b32.xlu0 %v148, 64
    %v219 = vpop.permute.xlu0 %218
    %220 = vrot.lane.b32.xlu0 %v151, 64
    %v221 = vpop.permute.xlu0 %220
    %v225 = vsel %vm195, %v216, 0
    %v228 = vsel %vm195, %v217, 0
    %230 = vmatpush.msra.mxu0 0.0
    %231 = vmatpush.msra.mxu0 0.0
    %232 = vmatpush.msra.mxu0 0.0
    %233 = vmatpush.msra.mxu0 0.0
    %234 = vmatpush.msra.mxu0 0.0
    %235 = vmatpush.msra.mxu0 0.0
    %236 = vmatpush.msra.mxu0 0.0
    %237 = vmatpush.msra.mxu0 0.0
    %238 = vmatpush.msra.mxu0 0.0
    %239 = vmatpush.msra.mxu0 0.0
    %240 = vmatpush.msra.mxu0 0.0
    %241 = vmatpush.msra.mxu0 0.0
    %242 = vmatpush.msra.mxu0 0.0
    %243 = vmatpush.msra.mxu0 0.0
    %244 = vmatpush.msra.mxu0 %v221
    %245 = vmatpush.msra.mxu0 %v219
    %246 = vmatmul.f32.gmra.mxu0 %v225
    %v247 = vpop.f32.mrf.mxu0
    %v248 = vadd.f32 0.0, %v247
    %249 = vmatmul.f32.gmra.mxu0 %v228
    %v250 = vpop.f32.mrf.mxu0
    %v251 = vadd.f32 0.0, %v250
    %252 = vdwg.mxu0
    %253 = vrot.lane.b32.xlu0 %v148, 120
    %v254 = vpop.permute.xlu0 %253
    %255 = vrot.lane.b32.xlu0 %v151, 120
    %v256 = vpop.permute.xlu0 %255
    %257 = vrot.lane.b32.xlu0 %v148, 88
    %v258 = vpop.permute.xlu0 %257
    %259 = vrot.lane.b32.xlu0 %v151, 88
    %v260 = vpop.permute.xlu0 %259
    %v261 = vsel %vm159, %v254, 0
    %v263 = vsel %vm159, %v256, 0
    %v265 = vsel %vm159, %v258, 0
    %v267 = vsel %vm159, %v260, 0
    %269 = vmatpush.xpose.msra.mxu0 0.0
    %270 = vmatpush.xpose.msra.mxu0 0.0
    %271 = vmatpush.xpose.msra.mxu0 0.0
    %272 = vmatpush.xpose.msra.mxu0 0.0
    %273 = vmatpush.xpose.msra.mxu0 0.0
    %274 = vmatpush.xpose.msra.mxu0 0.0
    %275 = vmatpush.xpose.msra.mxu0 0.0
    %276 = vmatpush.xpose.msra.mxu0 0.0
    %277 = vmatpush.xpose.msra.mxu0 0.0
    %278 = vmatpush.xpose.msra.mxu0 0.0
    %279 = vmatpush.xpose.msra.mxu0 0.0
    %280 = vmatpush.xpose.msra.mxu0 0.0
    %281 = vmatpush.xpose.msra.mxu0 0.0
    %282 = vmatpush.xpose.msra.mxu0 0.0
    %283 = vmatpush.xpose.msra.mxu0 %v267
    %284 = vmatpush.xpose.msra.mxu0 %v265
    %285 = vmatmul.f32.gmra.mxu0 %v261
    %v286 = vpop.f32.mrf.mxu0
    %v287 = vadd.f32 0.0, %v286
    %288 = vmatmul.f32.gmra.mxu0 %v263
    %v289 = vpop.f32.mrf.mxu0
    %v290 = vadd.f32 0.0, %v289
    %291 = vdwg.mxu0
    %v292 = vmul.f32 %v287, 0.35355338
    %v293 = vmul.f32 %v290, 0.35355338
    %v294 = vadd.f32 %v292, %v50
    %v295 = vadd.f32 %v293, %v51
    %v296 = vsel %vm195, %v294, -inf
    %297 = vmax.xlane.f32.xlu0 %v296
    %v298 = vpop.xlane.xlu0 %297
    %v299 = vsel %vm195, %v295, -inf
    %300 = vmax.xlane.f32.xlu0 %v299
    %v301 = vpop.xlane.xlu0 %300
    %v302 = vsub.f32 %v294, %v298
    %v303 = vsub.f32 %v295, %v301
    %v304 = vmul.f32 %v302, 1.442695
    %v305 = vpow.pop %v304
    %v306 = vmul.f32 %v303, 1.442695
    %v307 = vpow.pop %v306
    %v308 = vsel %vm195, %v305, 0.0
    %309 = vadd.xlane.f32.xlu0 %v308
    %v310 = vpop.xlane.xlu0 %309
    %v311 = vsel %vm195, %v307, 0.0
    %312 = vadd.xlane.f32.xlu0 %v311
    %v313 = vpop.xlane.xlu0 %312
    %v314 = vrcp.pop %v310
    %v315 = vrcp.pop %v313
    %v316 = vmul.f32 %v305, %v314
    %v317 = vmul.f32 %v307, %v315
    %318 = vrot.lane.b32.xlu0 %v148, 56
    %v319 = vpop.permute.xlu0 %318
    %320 = vrot.lane.b32.xlu0 %v151, 56
    %v321 = vpop.permute.xlu0 %320
    %v325 = vsel %vm195, %v316, 0
    %v328 = vsel %vm195, %v317, 0
    %330 = vmatpush.msra.mxu0 0.0
    %331 = vmatpush.msra.mxu0 0.0
    %332 = vmatpush.msra.mxu0 0.0
    %333 = vmatpush.msra.mxu0 0.0
    %334 = vmatpush.msra.mxu0 0.0
    %335 = vmatpush.msra.mxu0 0.0
    %336 = vmatpush.msra.mxu0 0.0
    %337 = vmatpush.msra.mxu0 0.0
    %338 = vmatpush.msra.mxu0 0.0
    %339 = vmatpush.msra.mxu0 0.0
    %340 = vmatpush.msra.mxu0 0.0
    %341 = vmatpush.msra.mxu0 0.0
    %342 = vmatpush.msra.mxu0 0.0
    %343 = vmatpush.msra.mxu0 0.0
    %344 = vmatpush.msra.mxu0 %v321
    %345 = vmatpush.msra.mxu0 %v319
    %346 = vmatmul.f32.gmra.mxu0 %v325
    %v347 = vpop.f32.mrf.mxu0
    %v348 = vadd.f32 0.0, %v347
    %349 = vmatmul.f32.gmra.mxu0 %v328
    %v350 = vpop.f32.mrf.mxu0
    %v351 = vadd.f32 0.0, %v350
    %352 = vdwg.mxu0
    %353 = vrot.lane.b32.xlu0 %v148, 112
    %v354 = vpop.permute.xlu0 %353
    %355 = vrot.lane.b32.xlu0 %v151, 112
    %v356 = vpop.permute.xlu0 %355
    %357 = vrot.lane.b32.xlu0 %v148, 80
    %v358 = vpop.permute.xlu0 %357
    %359 = vrot.lane.b32.xlu0 %v151, 80
    %v360 = vpop.permute.xlu0 %359
    %v361 = vsel %vm159, %v354, 0
    %v363 = vsel %vm159, %v356, 0
    %v365 = vsel %vm159, %v358, 0
    %v367 = vsel %vm159, %v360, 0
    %369 = vmatpush.xpose.msra.mxu0 0.0
    %370 = vmatpush.xpose.msra.mxu0 0.0
    %371 = vmatpush.xpose.msra.mxu0 0.0
    %372 = vmatpush.xpose.msra.mxu0 0.0
    %373 = vmatpush.xpose.msra.mxu0 0.0
    %374 = vmatpush.xpose.msra.mxu0 0.0
    %375 = vmatpush.xpose.msra.mxu0 0.0
    %376 = vmatpush.xpose.msra.mxu0 0.0
    %377 = vmatpush.xpose.msra.mxu0 0.0
    %378 = vmatpush.xpose.msra.mxu0 0.0
    %379 = vmatpush.xpose.msra.mxu0 0.0
    %380 = vmatpush.xpose.msra.mxu0 0.0
    %381 = vmatpush.xpose.msra.mxu0 0.0
    %382 = vmatpush.xpose.msra.mxu0 0.0
    %383 = vmatpush.xpose.msra.mxu0 %v367
    %384 = vmatpush.xpose.msra.mxu0 %v365
    %385 = vmatmul.f32.gmra.mxu0 %v361
    %v386 = vpop.f32.mrf.mxu0
    %v387 = vadd.f32 0.0, %v386
    %388 = vmatmul.f32.gmra.mxu0 %v363
    %v389 = vpop.f32.mrf.mxu0
    %v390 = vadd.f32 0.0, %v389
    %391 = vdwg.mxu0
    %v392 = vmul.f32 %v387, 0.35355338
    %v393 = vmul.f32 %v390, 0.35355338
    %v394 = vadd.f32 %v392, %v50
    %v395 = vadd.f32 %v393, %v51
    %v396 = vsel %vm195, %v394, -inf
    %397 = vmax.xlane.f32.xlu0 %v396
    %v398 = vpop.xlane.xlu0 %397
    %v399 = vsel %vm195, %v395, -inf
    %400 = vmax.xlane.f32.xlu0 %v399
    %v401 = vpop.xlane.xlu0 %400
    %v402 = vsub.f32 %v394, %v398
    %v403 = vsub.f32 %v395, %v401
    %v404 = vmul.f32 %v402, 1.442695
    %v405 = vpow.pop %v404
    %v406 = vmul.f32 %v403, 1.442695
    %v407 = vpow.pop %v406
    %v408 = vsel %vm195, %v405, 0.0
    %409 = vadd.xlane.f32.xlu0 %v408
    %v410 = vpop.xlane.xlu0 %409
    %v411 = vsel %vm195, %v407, 0.0
    %412 = vadd.xlane.f32.xlu0 %v411
    %v413 = vpop.xlane.xlu0 %412
    %v414 = vrcp.pop %v410
    %v415 = vrcp.pop %v413
    %v416 = vmul.f32 %v405, %v414
    %v417 = vmul.f32 %v407, %v415
    %418 = vrot.lane.b32.xlu0 %v148, 48
    %v419 = vpop.permute.xlu0 %418
    %420 = vrot.lane.b32.xlu0 %v151, 48
    %v421 = vpop.permute.xlu0 %420
    %v425 = vsel %vm195, %v416, 0
    %v428 = vsel %vm195, %v417, 0
    %430 = vmatpush.msra.mxu0 0.0
    %431 = vmatpush.msra.mxu0 0.0
    %432 = vmatpush.msra.mxu0 0.0
    %433 = vmatpush.msra.mxu0 0.0
    %434 = vmatpush.msra.mxu0 0.0
    %435 = vmatpush.msra.mxu0 0.0
    %436 = vmatpush.msra.mxu0 0.0
    %437 = vmatpush.msra.mxu0 0.0
    %438 = vmatpush.msra.mxu0 0.0
    %439 = vmatpush.msra.mxu0 0.0
    %440 = vmatpush.msra.mxu0 0.0
    %441 = vmatpush.msra.mxu0 0.0
    %442 = vmatpush.msra.mxu0 0.0
    %443 = vmatpush.msra.mxu0 0.0
    %444 = vmatpush.msra.mxu0 %v421
    %445 = vmatpush.msra.mxu0 %v419
    %446 = vmatmul.f32.gmra.mxu0 %v425
    %v447 = vpop.f32.mrf.mxu0
    %v448 = vadd.f32 0.0, %v447
    %449 = vmatmul.f32.gmra.mxu0 %v428
    %v450 = vpop.f32.mrf.mxu0
    %v451 = vadd.f32 0.0, %v450
    %452 = vdwg.mxu0
    %453 = vrot.lane.b32.xlu0 %v148, 104
    %v454 = vpop.permute.xlu0 %453
    %455 = vrot.lane.b32.xlu0 %v151, 104
    %v456 = vpop.permute.xlu0 %455
    %457 = vrot.lane.b32.xlu0 %v148, 72
    %v458 = vpop.permute.xlu0 %457
    %459 = vrot.lane.b32.xlu0 %v151, 72
    %v460 = vpop.permute.xlu0 %459
    %v461 = vsel %vm159, %v454, 0
    %v463 = vsel %vm159, %v456, 0
    %v465 = vsel %vm159, %v458, 0
    %v467 = vsel %vm159, %v460, 0
    %469 = vmatpush.xpose.msra.mxu0 0.0
    %470 = vmatpush.xpose.msra.mxu0 0.0
    %471 = vmatpush.xpose.msra.mxu0 0.0
    %472 = vmatpush.xpose.msra.mxu0 0.0
    %473 = vmatpush.xpose.msra.mxu0 0.0
    %474 = vmatpush.xpose.msra.mxu0 0.0
    %475 = vmatpush.xpose.msra.mxu0 0.0
    %476 = vmatpush.xpose.msra.mxu0 0.0
    %477 = vmatpush.xpose.msra.mxu0 0.0
    %478 = vmatpush.xpose.msra.mxu0 0.0
    %479 = vmatpush.xpose.msra.mxu0 0.0
    %480 = vmatpush.xpose.msra.mxu0 0.0
    %481 = vmatpush.xpose.msra.mxu0 0.0
    %482 = vmatpush.xpose.msra.mxu0 0.0
    %483 = vmatpush.xpose.msra.mxu0 %v467
    %484 = vmatpush.xpose.msra.mxu0 %v465
    %485 = vmatmul.f32.gmra.mxu0 %v461
    %v486 = vpop.f32.mrf.mxu0
    %v487 = vadd.f32 0.0, %v486
    %488 = vmatmul.f32.gmra.mxu0 %v463
    %v489 = vpop.f32.mrf.mxu0
    %v490 = vadd.f32 0.0, %v489
    %491 = vdwg.mxu0
    %v492 = vmul.f32 %v487, 0.35355338
    %v493 = vmul.f32 %v490, 0.35355338
    %v494 = vadd.f32 %v492, %v50
    %v495 = vadd.f32 %v493, %v51
    %v496 = vsel %vm195, %v494, -inf
    %497 = vmax.xlane.f32.xlu0 %v496
    %v498 = vpop.xlane.xlu0 %497
    %v499 = vsel %vm195, %v495, -inf
    %500 = vmax.xlane.f32.xlu0 %v499
    %v501 = vpop.xlane.xlu0 %500
    %v502 = vsub.f32 %v494, %v498
    %v503 = vsub.f32 %v495, %v501
    %v504 = vmul.f32 %v502, 1.442695
    %v505 = vpow.pop %v504
    %v506 = vmul.f32 %v503, 1.442695
    %v507 = vpow.pop %v506
    %v508 = vsel %vm195, %v505, 0.0
    %509 = vadd.xlane.f32.xlu0 %v508
    %v510 = vpop.xlane.xlu0 %509
    %v511 = vsel %vm195, %v507, 0.0
    %512 = vadd.xlane.f32.xlu0 %v511
    %v513 = vpop.xlane.xlu0 %512
    %v514 = vrcp.pop %v510
    %v515 = vrcp.pop %v513
    %v516 = vmul.f32 %v505, %v514
    %v517 = vmul.f32 %v507, %v515
    %518 = vrot.lane.b32.xlu0 %v148, 40
    %v519 = vpop.permute.xlu0 %518
    %520 = vrot.lane.b32.xlu0 %v151, 40
    %v521 = vpop.permute.xlu0 %520
    %v525 = vsel %vm195, %v516, 0
    %v528 = vsel %vm195, %v517, 0
    %530 = vmatpush.msra.mxu0 0.0
    %531 = vmatpush.msra.mxu0 0.0
    %532 = vmatpush.msra.mxu0 0.0
    %533 = vmatpush.msra.mxu0 0.0
    %534 = vmatpush.msra.mxu0 0.0
    %535 = vmatpush.msra.mxu0 0.0
    %536 = vmatpush.msra.mxu0 0.0
    %537 = vmatpush.msra.mxu0 0.0
    %538 = vmatpush.msra.mxu0 0.0
    %539 = vmatpush.msra.mxu0 0.0
    %540 = vmatpush.msra.mxu0 0.0
    %541 = vmatpush.msra.mxu0 0.0
    %542 = vmatpush.msra.mxu0 0.0
    %543 = vmatpush.msra.mxu0 0.0
    %544 = vmatpush.msra.mxu0 %v521
    %545 = vmatpush.msra.mxu0 %v519
    %546 = vmatmul.f32.gmra.mxu0 %v525
    %v547 = vpop.f32.mrf.mxu0
    %v548 = vadd.f32 0.0, %v547
    %549 = vmatmul.f32.gmra.mxu0 %v528
    %v550 = vpop.f32.mrf.mxu0
    %v551 = vadd.f32 0.0, %v550
    %552 = vdwg.mxu0
    %555 = vrot.lane.b32.xlu0 %v348, 8
    %v556 = vpop.permute.xlu0 %555
    %557 = vrot.lane.b32.xlu0 %v351, 8
    %v558 = vpop.permute.xlu0 %557
    %563 = vrot.lane.b32.xlu0 %v448, 16
    %v564 = vpop.permute.xlu0 %563
    %565 = vrot.lane.b32.xlu0 %v451, 16
    %v566 = vpop.permute.xlu0 %565
    %571 = vrot.lane.b32.xlu0 %v548, 24
    %v572 = vpop.permute.xlu0 %571
    %573 = vrot.lane.b32.xlu0 %v551, 24
    %v574 = vpop.permute.xlu0 %573
    %v577 = vsel %vm159, %v248, %v556
    %v578 = vsel %vm159, %v251, %v558
    %v579 = vsel %vm195, %v577, %v564
    %v580 = vsel %vm195, %v578, %v566
    %vm581 = vcmask 195584
    %v582 = vsel %vm581, %v579, %v572
    %v583 = vsel %vm581, %v580, %v574
    %v584 = vld [vmem:[%s6] sm:$0xff]
    %v585 = vld [vmem:[%s6 + $0x8] sm:$0xff]
    %v586 = vld [vmem:[%s6 + $0x10] sm:$0xff]
    %v587 = vld [vmem:[%s6 + $0x18] sm:$0xff]
    %v588 = vld [vmem:[%s7] sm:$0x1]
    %v590 = vperm.slane %v588, 0
    %v593 = vsel %vm54, %v582, 0
    %v596 = vsel %vm54, %v583, 0
    %598 = vmatpush.msra.mxu0 0.0
    %599 = vmatpush.msra.mxu0 0.0
    %600 = vmatpush.msra.mxu0 0.0
    %601 = vmatpush.msra.mxu0 0.0
    %602 = vmatpush.msra.mxu0 0.0
    %603 = vmatpush.msra.mxu0 0.0
    %604 = vmatpush.msra.mxu0 0.0
    %605 = vmatpush.msra.mxu0 0.0
    %606 = vmatpush.msra.mxu0 0.0
    %607 = vmatpush.msra.mxu0 0.0
    %608 = vmatpush.msra.mxu0 0.0
    %609 = vmatpush.msra.mxu0 0.0
    %610 = vmatpush.msra.mxu0 %v587
    %611 = vmatpush.msra.mxu0 %v586
    %612 = vmatpush.msra.mxu0 %v585
    %613 = vmatpush.msra.mxu0 %v584
    %614 = vmatmul.f32.gmra.mxu0 %v593
    %v615 = vpop.f32.mrf.mxu0
    %v616 = vadd.f32 %v590, %v615
    %617 = vmatmul.f32.gmra.mxu0 %v596
    %v618 = vpop.f32.mrf.mxu0
    %v619 = vadd.f32 %v590, %v618
    %620 = vdwg.mxu0
    %v621 = vadd.f32 %v48, %v616
    %v622 = vadd.f32 %v49, %v619
    %v623 = vld [vmem:[%s8] sm:$0x1]
    %v624 = vld [vmem:[%s9] sm:$0x1]
    %v625 = vsel %vm54, %v621, 0.0
    %626 = vadd.xlane.f32.xlu0 %v625
    %v627 = vpop.xlane.xlu0 %626
    %v628 = vsel %vm54, %v622, 0.0
    %629 = vadd.xlane.f32.xlu0 %v628
    %v630 = vpop.xlane.xlu0 %629
    %v631 = vmul.f32 %v627, %v67
    %v632 = vmul.f32 %v630, %v67
    %v633 = vsub.f32 %v621, %v631
    %v634 = vsub.f32 %v622, %v632
    %v635 = vmul.f32 %v633, %v633
    %v636 = vmul.f32 %v634, %v634
    %v637 = vsel %vm54, %v635, 0.0
    %638 = vadd.xlane.f32.xlu0 %v637
    %v639 = vpop.xlane.xlu0 %638
    %v640 = vsel %vm54, %v636, 0.0
    %641 = vadd.xlane.f32.xlu0 %v640
    %v642 = vpop.xlane.xlu0 %641
    %v643 = vmul.f32 %v639, %v67
    %v644 = vmul.f32 %v642, %v67
    %v645 = vadd.f32 %v643, 1e-05
    %v646 = vadd.f32 %v644, 1e-05
    %v647 = vrsqrt.pop %v645
    %v648 = vmul.f32 %v647, %v645
    %v649 = vmul.f32 %v648, %v647
    %v650 = vmul.f32 0.5, %v649
    %v651 = vsub.f32 1.5, %v650
    %v652 = vmul.f32 %v647, %v651
    %vm653 = vweird.f32 %v645
    %vm654 = vweird.f32 %v647
    %vm655 = vmor %vm653, %vm654
    %v656 = vsel %vm655, %v647, %v652
    %v657 = vrsqrt.pop %v646
    %v658 = vmul.f32 %v657, %v646
    %v659 = vmul.f32 %v658, %v657
    %v660 = vmul.f32 0.5, %v659
    %v661 = vsub.f32 1.5, %v660
    %v662 = vmul.f32 %v657, %v661
    %vm663 = vweird.f32 %v646
    %vm664 = vweird.f32 %v657
    %vm665 = vmor %vm663, %vm664
    %v666 = vsel %vm665, %v657, %v662
    %v667 = vmul.f32 %v633, %v656
    %v668 = vmul.f32 %v634, %v666
    %v670 = vperm.slane %v623, 0
    %v672 = vmul.f32 %v667, %v670
    %v673 = vmul.f32 %v668, %v670
    %v675 = vperm.slane %v624, 0
    %v677 = vadd.f32 %v672, %v675
    %v678 = vadd.f32 %v673, %v675
    %v679 = vld [vmem:[%s10] sm:$0xff]
    %v680 = vld [vmem:[%s10 + $0x8] sm:$0xff]
    %v681 = vld [vmem:[%s10 + $0x10] sm:$0xff]
    %v682 = vld [vmem:[%s10 + $0x18] sm:$0xff]
    %v683 = vld [vmem:[%s11] sm:$0x1]
    %v685 = vperm.slane %v683, 0
    %v688 = vsel %vm54, %v677, 0
    %v691 = vsel %vm54, %v678, 0
    %693 = vmatpush.msra.mxu0 0.0
    %694 = vmatpush.msra.mxu0 0.0
    %695 = vmatpush.msra.mxu0 0.0
    %696 = vmatpush.msra.mxu0 0.0
    %697 = vmatpush.msra.mxu0 0.0
    %698 = vmatpush.msra.mxu0 0.0
    %699 = vmatpush.msra.mxu0 0.0
    %700 = vmatpush.msra.mxu0 0.0
    %701 = vmatpush.msra.mxu0 0.0
    %702 = vmatpush.msra.mxu0 0.0
    %703 = vmatpush.msra.mxu0 0.0
    %704 = vmatpush.msra.mxu0 0.0
    %705 = vmatpush.msra.mxu0 %v682
    %706 = vmatpush.msra.mxu0 %v681
    %707 = vmatpush.msra.mxu0 %v680
    %708 = vmatpush.msra.mxu0 %v679
    %709 = vmatmul.f32.gmra.mxu0 %v688
    %v710 = vpop.f32.mrf.mxu0
    %v711 = vadd.f32 %v685, %v710
    %712 = vmatmul.f32.gmra.mxu0 %v691
    %v713 = vpop.f32.mrf.mxu0
    %v714 = vadd.f32 %v685, %v713
    %715 = vdwg.mxu0
    %v716 = vmul.f32 %v711, %v711
    %v717 = vmul.f32 %v714, %v714
    %v718 = vmul.f32 %v711, %v716
    %v719 = vmul.f32 %v714, %v717
    %v720 = vmul.f32 %v718, 0.044715
    %v721 = vmul.f32 %v719, 0.044715
    %v722 = vadd.f32 %v711, %v720
    %v723 = vadd.f32 %v714, %v721
    %v724 = vmul.f32 %v722, 0.7978846
    %v725 = vmul.f32 %v723, 0.7978846
    %v726 = vtanh.pop %v724
    %v727 = vtanh.pop %v725
    %v728 = vadd.f32 %v726, 1.0
    %v729 = vadd.f32 %v727, 1.0
    %v730 = vmul.f32 %v728, 0.5
    %v731 = vmul.f32 %v729, 0.5
    %v732 = vmul.f32 %v711, %v730
    %v733 = vmul.f32 %v714, %v731
    %v734 = vld [vmem:[%s12] sm:$0xff]
    %v735 = vld [vmem:[%s12 + $0x8] sm:$0xff]
    %v736 = vld [vmem:[%s12 + $0x10] sm:$0xff]
    %v737 = vld [vmem:[%s12 + $0x18] sm:$0xff]
    %v738 = vld [vmem:[%s12 + $0x20] sm:$0xff]
    %v739 = vld [vmem:[%s12 + $0x28] sm:$0xff]
    %v740 = vld [vmem:[%s12 + $0x30] sm:$0xff]
    %v741 = vld [vmem:[%s12 + $0x38] sm:$0xff]
    %v742 = vld [vmem:[%s12 + $0x40] sm:$0xff]
    %v743 = vld [vmem:[%s12 + $0x48] sm:$0xff]
    %v744 = vld [vmem:[%s12 + $0x50] sm:$0xff]
    %v745 = vld [vmem:[%s12 + $0x58] sm:$0xff]
    %v746 = vld [vmem:[%s12 + $0x60] sm:$0xff]
    %v747 = vld [vmem:[%s12 + $0x68] sm:$0xff]
    %v748 = vld [vmem:[%s12 + $0x70] sm:$0xff]
    %v749 = vld [vmem:[%s12 + $0x78] sm:$0xff]
    %v750 = vld [vmem:[%s13] sm:$0x1]
    %v752 = vperm.slane %v750, 0
    %754 = vmatpush.msra.mxu0 %v749
    %755 = vmatpush.msra.mxu0 %v748
    %756 = vmatpush.msra.mxu0 %v747
    %757 = vmatpush.msra.mxu0 %v746
    %758 = vmatpush.msra.mxu0 %v745
    %759 = vmatpush.msra.mxu0 %v744
    %760 = vmatpush.msra.mxu0 %v743
    %761 = vmatpush.msra.mxu0 %v742
    %762 = vmatpush.msra.mxu0 %v741
    %763 = vmatpush.msra.mxu0 %v740
    %764 = vmatpush.msra.mxu0 %v739
    %765 = vmatpush.msra.mxu0 %v738
    %766 = vmatpush.msra.mxu0 %v737
    %767 = vmatpush.msra.mxu0 %v736
    %768 = vmatpush.msra.mxu0 %v735
    %769 = vmatpush.msra.mxu0 %v734
    %770 = vmatmul.f32.gmra.mxu0 %v732
    %v771 = vpop.f32.mrf.mxu0
    %v772 = vadd.f32 %v752, %v771
    %773 = vmatmul.f32.gmra.mxu0 %v733
    %v774 = vpop.f32.mrf.mxu0
    %v775 = vadd.f32 %v752, %v774
    %776 = vdwg.mxu0
    %v777 = vadd.f32 %v621, %v772
    %v778 = vadd.f32 %v622, %v775
    %779 = vst.msk [vmem:[#allocation2] sm:$0xff] %vm54, %v777
    %780 = vst.msk [vmem:[#allocation2 + $0x8] sm:$0xff] %vm54, %v778
    // Predicated region
    $region58: #{tpu_custom_call.1} parent=1 // pred_check
      _
    $region59: #{tpu_custom_call.1} parent=1 // pred_check_branch
      %782 = sbr.rel (0) target = $region61
    $region60: #{tpu_custom_call.1} parent=1 // pred_region
      %784 = vsyncadd [#allocation3], 0
      %s785 = sshll.u32 [#allocation2], 4
      %s786 = int_to_ptr.vmem [resolvable:$true] %s785
      %s787 = sshll.u32 %s14, 4
      %s788 = int_to_ptr.hbm [resolvable:$true] %s787
      %793 = dma.vmem_to_hbm [thread:$0]  %s786, 256, %s788, [#allocation3], 128, 128, 8
    $region61: #{tpu_custom_call.1} parent=1 // pred_fallthru
      _
    // Predicated region
    $region62: #{tpu_custom_call.1} parent=1 // pred_check
      _
    $region63: #{tpu_custom_call.1} parent=1 // pred_check_branch
      %795 = sbr.rel (0) target = $region65
    $region64: #{tpu_custom_call.1} parent=1 // pred_region
      %797 = dma.done [#allocation3], 256
    $region65: #{tpu_custom_call.1} parent=1 // pred_fallthru
      _
    %798 = vsyncpa [#allocation3], 1

</llo_original>
